<compile_context>
chip_gen: v7x
topology: tpu7x:2x2x1
jax: 0.10.0
libtpu: 0.0.40
codegen_flags: <defaults>
</compile_context>

<pallas_src>
import functools

import jax
import jax.numpy as jnp
from jax.experimental import pallas as pl
from jax.experimental.pallas import tpu as pltpu


def _round_up(x, m):
    return ((x + m - 1) // m) * m


def _spec(shape, index_map, mode=None):
    if mode is None:
        return pl.BlockSpec(shape, index_map)
    return pl.BlockSpec(shape, index_map, pipeline_mode=mode)


# --------------------------------------------------------------------------- #
# Kernel: one (tb, tn) output tile.
#   dense : bf16 x @ bf16 W^T-tile  (MXU, f32 accumulation)
#   lora  : (x @ A) @ (scale * B)   computed separately in f32 so the adapter
#           delta is not rounded away by a bf16 weight fold (rank is 4..64,
#           so the two extra matmuls are negligible work)
#   bias  : f32 epilogue
# --------------------------------------------------------------------------- #
def _lora_linear_kernel(x_ref, w_ref, b_ref, a_ref, lb_ref, o_ref):
    x = x_ref[...]                                                     # (tb, K) bf16
    acc = jnp.dot(x, w_ref[...], preferred_element_type=jnp.float32)   # dense path
    xa = jnp.dot(x, a_ref[...], preferred_element_type=jnp.float32)    # (tb, r) f32
    acc = acc + jnp.dot(xa, lb_ref[...], preferred_element_type=jnp.float32)
    o_ref[...] = (acc + b_ref[...]).astype(o_ref.dtype)


def prepare_lora_linear(W, b, A, B, alpha, rank):
    """One-time parameter preprocessing (call once at load time, NOT per step).

    W: (out_f, in_f) nn.Linear weight, b: (out_f,), A: (in_f, rank), B: (rank, out_f).
    Returns (w_pad, b_pad, a_pad, b_lora) ready for `lora_linear_forward`.
    """
    out_f, in_f = W.shape
    r = A.shape[1]
    n_pad = _round_up(out_f, 128)            # lane-dense output dimension
    r_pad = _round_up(max(r, 8), 8)          # sublane-aligned rank
    scale = jnp.float32(alpha) / jnp.float32(rank)

    w_pad = jnp.pad(jnp.asarray(W, jnp.float32).T,
                    ((0, 0), (0, n_pad - out_f))).astype(jnp.bfloat16)   # (K, Npad)
    b_pad = jnp.pad(jnp.asarray(b, jnp.float32),
                    (0, n_pad - out_f)).reshape(1, n_pad)                # (1, Npad) f32
    a_pad = jnp.pad(jnp.asarray(A, jnp.float32),
                    ((0, 0), (0, r_pad - r))).astype(jnp.bfloat16)       # (K, Rpad)
    b_lora = scale * jnp.pad(jnp.asarray(B, jnp.float32),
                             ((0, r_pad - r), (0, n_pad - out_f)))       # (Rpad, Npad) f32
    return w_pad, b_pad, a_pad, b_lora


@functools.partial(jax.jit,
                   static_argnames=("out_features", "tb", "tn", "out_dtype"))
def lora_linear_forward(x, w_pad, b_pad, a_pad, b_lora, *,
                        out_features, tb=512, tn=256, out_dtype=jnp.float32):
    """x: (..., in_features) -> (..., out_features); == LoRa_linear.forward."""
    in_f, n_pad = w_pad.shape
    r_pad = a_pad.shape[1]

    # ---- N tiling: largest multiple-of-128 divisor of n_pad, capped at tn ----
    tn_eff = min(_round_up(tn, 128), n_pad)
    while n_pad % tn_eff:
        tn_eff -= 128
    n_tiles = n_pad // tn_eff

    # ---- flatten leading dims; balanced M tiling; bf16 activations -----------
    lead = x.shape[:-1]
    x2 = x.reshape(-1, in_f)
    m = x2.shape[0]
    m8 = _round_up(max(m, 1), 8)
    num_m = pl.cdiv(m8, max(8, min(tb, m8)))
    if n_tiles == 1 and num_m == 1 and m8 >= 16:
        num_m = 2                     # guarantee >=2 parallel steps (v7x 2nd TC)
    tb_eff = _round_up(pl.cdiv(m8, num_m), 8)
    m_tiles = pl.cdiv(m8, tb_eff)
    m_pad = tb_eff * m_tiles
    x2 = jnp.pad(x2, ((0, m_pad - m), (0, 0))).astype(jnp.bfloat16)  # fused pad+cast

    # ---- single-buffer operands whose block index never changes --------------
    pinned = pl.Buffered(1)
    n_mode = pinned if n_tiles == 1 else None

    out_bytes = jnp.dtype(out_dtype).itemsize
    vmem_est = (2 * tb_eff * in_f * 2                                   # x dbl-buf bf16
                + (1 if n_tiles == 1 else 2) * (in_f * tn_eff * 2       # W tile(s)
                                                + tn_eff * 4            # bias tile(s)
                                                + r_pad * tn_eff * 4)   # lora-B tile(s)
                + in_f * r_pad * 2                                      # A (pinned)
                + 2 * tb_eff * tn_eff * out_bytes)                      # out dbl-buf
    vmem_limit = int(min(max(2 * vmem_est + (4 << 20), 32 << 20), 64 << 20))

    cost = pl.CostEstimate(
        flops=2 * m_pad * in_f * n_pad
              + 2 * m_pad * in_f * r_pad + 2 * m_pad * r_pad * n_pad,
        transcendentals=0,
        bytes_accessed=x2.size * 2 + w_pad.size * 2 + a_pad.size * 2
                       + b_lora.size * 4 + n_pad * 4 + m_pad * n_pad * out_bytes)

    out = pl.pallas_call(
        _lora_linear_kernel,
        out_shape=jax.ShapeDtypeStruct((m_pad, n_pad), out_dtype),
        grid_spec=pltpu.PrefetchScalarGridSpec(
            num_scalar_prefetch=0,
            grid=(n_tiles, m_tiles),          # n outer -> W streamed once overall
            in_specs=[
                _spec((tb_eff, in_f), lambda j, i: (i, 0)),              # x tile
                _spec((in_f, tn_eff), lambda j, i: (0, j), n_mode),      # W tile
                _spec((1, tn_eff), lambda j, i: (0, j), n_mode),         # bias tile
                _spec((in_f, r_pad), lambda j, i: (0, 0), pinned),       # LoRA A
                _spec((r_pad, tn_eff), lambda j, i: (0, j), n_mode),     # scale*LoRA B
            ],
            out_specs=pl.BlockSpec((tb_eff, tn_eff), lambda j, i: (i, j)),
        ),
        compiler_params=pltpu.CompilerParams(
            dimension_semantics=("parallel", "parallel"),
            vmem_limit_bytes=vmem_limit),
        cost_estimate=cost,
    )(x2, w_pad, b_pad, a_pad, b_lora)

    return out[:m, :out_features].reshape(*lead, out_features)


def lora_linear_reference(x, W, b, A, B, alpha, rank):
    """Pure-JAX reference matching the PyTorch forward exactly (f32 throughout)."""
    scale = alpha / rank
    y = jnp.einsum("...k,nk->...n", x, W) + b
    return y + scale * jnp.einsum("...k,kr,rn->...n", x, A, B)


if __name__ == "__main__":
    key = jax.random.PRNGKey(0)
    kx, kw, kb, ka, kB = jax.random.split(key, 5)

    batch, seq, in_features, out_features, rank, alpha = 2, 8, 32, 64, 4, 8.0

    x = jax.random.normal(kx, (batch, seq, in_features), jnp.float32)
    W = (jax.random.normal(kw, (out_features, in_features), jnp.float32)
         / jnp.sqrt(jnp.float32(in_features)))
    b = jax.random.normal(kb, (out_features,), jnp.float32) * 0.01
    A = jax.random.normal(ka, (in_features, rank), jnp.float32)
    # NOTE: the PyTorch module initializes B to zeros (LoRA branch == 0 at init);
    # a small non-zero B is used here so the adapter path is actually exercised.
    B = jax.random.normal(kB, (rank, out_features), jnp.float32) * 0.01

    # One-time, load-time parameter prep (hoisted out of the per-call path).
    prep = prepare_lora_linear(W, b, A, B, alpha, rank)

    y = lora_linear_forward(x, *prep, out_features=out_features)
    jax.block_until_ready(y)

    ref = lora_linear_reference(x, W, b, A, B, alpha, rank)
    assert y.shape == (batch, seq, out_features)
    err = float(jnp.max(jnp.abs(y - ref)))
    # bf16 dense-path operands vs f32 reference -> loose tolerance
    assert jnp.allclose(y, ref, atol=5e-2, rtol=5e-2), err
    print("KERNEL_OK")
</pallas_src>

<mosaic_0001>
module attributes {stable_mosaic.version = 11 : i64} {
  func.func @_lora_linear_kernel(%arg0: i32, %arg1: i32, %arg2: memref<8x32xbf16, #tpu.memory_space<vmem>>, %arg3: memref<32x128xbf16, #tpu.memory_space<vmem>>, %arg4: memref<1x128xf32, #tpu.memory_space<vmem>>, %arg5: memref<32x8xbf16, #tpu.memory_space<vmem>>, %arg6: memref<8x128xf32, #tpu.memory_space<vmem>>, %arg7: memref<8x128xf32, #tpu.memory_space<vmem>>) attributes {dimension_semantics = [#tpu.dimension_semantics<parallel>, #tpu.dimension_semantics<parallel>], iteration_bounds = array<i64: 1, 2>, scalar_prefetch = 0 : i64, scratch_operands = 0 : i64, tpu.core_type = #tpu.core_type<tc>, window_params = [{transform_indices = @transform_0, window_bounds = array<i64: 8, 32>}, {pipeline_mode = #tpu.pipeline_mode<synchronous>, transform_indices = @transform_1, window_bounds = array<i64: 32, 128>}, {pipeline_mode = #tpu.pipeline_mode<synchronous>, transform_indices = @transform_2, window_bounds = array<i64: 1, 128>}, {pipeline_mode = #tpu.pipeline_mode<synchronous>, transform_indices = @transform_3, window_bounds = array<i64: 32, 8>}, {pipeline_mode = #tpu.pipeline_mode<synchronous>, transform_indices = @transform_4, window_bounds = array<i64: 8, 128>}, {transform_indices = @transform_5, window_bounds = array<i64: 8, 128>}]} {
    %c0 = arith.constant 0 : index
    %c0_0 = arith.constant 0 : index
    %0 = vector.load %arg2[%c0, %c0_0] : memref<8x32xbf16, #tpu.memory_space<vmem>>, vector<8x32xbf16>
    %c0_1 = arith.constant 0 : index
    %c0_2 = arith.constant 0 : index
    %1 = vector.load %arg3[%c0_1, %c0_2] : memref<32x128xbf16, #tpu.memory_space<vmem>>, vector<32x128xbf16>
    %cst = arith.constant dense<0.000000e+00> : vector<8x128xf32>
    %2 = tpu.matmul %0, %1, %cst {dimension_numbers = #tpu.dot_dimension_numbers<[1], [0], [0], [1], [0, 0, 1, 1], [], []>} : vector<8x32xbf16>, vector<32x128xbf16>, vector<8x128xf32> -> vector<8x128xf32>
    %c0_3 = arith.constant 0 : index
    %c0_4 = arith.constant 0 : index
    %3 = vector.load %arg5[%c0_3, %c0_4] : memref<32x8xbf16, #tpu.memory_space<vmem>>, vector<32x8xbf16>
    %cst_5 = arith.constant dense<0.000000e+00> : vector<8x8xf32>
    %4 = tpu.matmul %0, %3, %cst_5 {dimension_numbers = #tpu.dot_dimension_numbers<[1], [0], [0], [1], [0, 0, 1, 1], [], []>} : vector<8x32xbf16>, vector<32x8xbf16>, vector<8x8xf32> -> vector<8x8xf32>
    %c0_6 = arith.constant 0 : index
    %c0_7 = arith.constant 0 : index
    %5 = vector.load %arg6[%c0_6, %c0_7] : memref<8x128xf32, #tpu.memory_space<vmem>>, vector<8x128xf32>
    %cst_8 = arith.constant dense<0.000000e+00> : vector<8x128xf32>
    %6 = tpu.matmul %4, %5, %cst_8 {dimension_numbers = #tpu.dot_dimension_numbers<[1], [0], [0], [1], [0, 0, 1, 1], [], []>} : vector<8x8xf32>, vector<8x128xf32>, vector<8x128xf32> -> vector<8x128xf32>
    %7 = arith.addf %2, %6 : vector<8x128xf32>
    %c0_9 = arith.constant 0 : index
    %c0_10 = arith.constant 0 : index
    %8 = vector.load %arg4[%c0_9, %c0_10] : memref<1x128xf32, #tpu.memory_space<vmem>>, vector<1x128xf32>
    %9 = vector.broadcast %8 : vector<1x128xf32> to vector<8x128xf32>
    %10 = arith.addf %7, %9 : vector<8x128xf32>
    %c0_11 = arith.constant 0 : index
    %c0_12 = arith.constant 0 : index
    %11 = vector.load %arg7[%c0_11, %c0_12] : memref<8x128xf32, #tpu.memory_space<vmem>>, vector<8x128xf32>
    tpu.vector_store %arg7[%c0_11, %c0_12], %10 {strides = array<i32>} : memref<8x128xf32, #tpu.memory_space<vmem>>, vector<8x128xf32>,
    return
  }
  func.func @transform_0(%arg0: i32, %arg1: i32) -> (i32, i32) {
    %c0_i32 = arith.constant 0 : i32
    %c0_i32_0 = arith.constant 0 : i32
    return %arg1, %c0_i32 : i32, i32
  }
  func.func @transform_1(%arg0: i32, %arg1: i32) -> (i32, i32) {
    %c0_i32 = arith.constant 0 : i32
    %c0_i32_0 = arith.constant 0 : i32
    return %c0_i32, %arg0 : i32, i32
  }
  func.func @transform_2(%arg0: i32, %arg1: i32) -> (i32, i32) {
    %c0_i32 = arith.constant 0 : i32
    %c0_i32_0 = arith.constant 0 : i32
    return %c0_i32, %arg0 : i32, i32
  }
  func.func @transform_3(%arg0: i32, %arg1: i32) -> (i32, i32) {
    %c0_i32 = arith.constant 0 : i32
    %c0_i32_0 = arith.constant 0 : i32
    %c0_i32_1 = arith.constant 0 : i32
    return %c0_i32, %c0_i32_0 : i32, i32
  }
  func.func @transform_4(%arg0: i32, %arg1: i32) -> (i32, i32) {
    %c0_i32 = arith.constant 0 : i32
    %c0_i32_0 = arith.constant 0 : i32
    return %c0_i32, %arg0 : i32, i32
  }
  func.func @transform_5(%arg0: i32, %arg1: i32) -> (i32, i32) {
    %c0_i32 = arith.constant 0 : i32
    return %arg1, %arg0 : i32, i32
  }
}

</mosaic_0001>

<llo_original>
// kernel: lora_linear_forward.1
$region0: #{lora_linear_forward.1}
  #allocation0 [shape = 'u32[]', space=smem, size = 0x4, offset = 0x4, fixed_abs, tag = 'smem constant byte address 0x4 - core index']
  #allocation1 [shape = 'u32[144,128]{1,0:T(1,128)}', space=vmem, size = 0x12000, scoped, tag = 'internal scratch']
  %s0 = inlined_call_operand.vmem [shape: bf16[16,32], index: 0, kind: input, shape index: {}]
  %s1 = inlined_call_operand.vmem [shape: bf16[32,128], index: 1, kind: input, shape index: {}]
  %s2 = inlined_call_operand.vmem [shape: f32[1,128], index: 2, kind: input, shape index: {}]
  %s3 = inlined_call_operand.vmem [shape: bf16[32,8], index: 3, kind: input, shape index: {}]
  %s4 = inlined_call_operand.vmem [shape: f32[8,128], index: 4, kind: input, shape index: {}]
  %s5 = inlined_call_operand.vmem [shape: f32[16,128], index: 5, kind: output, shape index: {}]
  %s6 = sld [smem:[#allocation0]]
  $region53: #{lora_linear_forward.1} parent=0
    _
  %s8 = ssub.s32 1, %s6
  %s9 = scalar_select 0, %s8, %s6
  loop: start=0, step=1, limit=4
  $region2: #{lora_linear_forward.1} parent=0 // loop_pre_header
    _
  $region3: #{lora_linear_forward.1} parent=0 // loop_header
    %s11 = sphi 0, %s15
    %p12 = scmp.ge.s32.totalorder %s11, 4
    %s18 = sphi 0, %s30
    %s19 = sphi 0, %s26
    %s20 = sphi 0, %s18
    %s21 = sphi 0, %s19
    %s22 = sphi 0, %s20
    %s23 = sphi 0, %s21
    %s33 = sphi 0, %s35
    %s36 = sphi 0, %s33
    %s37 = sphi 0, %s36
    %s53 = sphi 0, %s37
    %s59 = sphi 0, %s61
    %s62 = sphi 0, %s59
    %s63 = sphi 0, %s62
    %s79 = sphi 0, %s63
    %s85 = sphi 0, %s87
    %s88 = sphi 0, %s85
    %s89 = sphi 0, %s88
    %s105 = sphi 0, %s89
    %s109 = sphi 0, %s109
    %s111 = sphi 0, %s109
    %s112 = sphi 0, %s111
    %s126 = sphi 0, %s112
    %s132 = sphi 0, %s134
    %s135 = sphi 0, %s132
    %s136 = sphi 0, %s135
    %s152 = sphi 0, %s136
    %s160 = sphi 0, %s162
    %s163 = sphi 0, %s160
    %s164 = sphi 0, %s163
    %s180 = sphi 0, %s164
  $region4: #{lora_linear_forward.1} parent=0 // loop_header_branch
    %14 = sbr.rel (%p12) target = $region8
  $region5: #{lora_linear_forward.1} parent=0 // loop_body
    %s16 = ssub.s32 %s11, 1
    %s17 = ssub.s32 %s11, 2
    %s24 = sadd.s32 1, %s19
    %p25 = scmp.ge.s32.totalorder %s24, 2
    %s26 = scalar_select %p25, 0, %s24
    %s27 = sadd.s32 1, %s18
    %s28 = scalar_select %p25, %s27, %s18
    %p29 = scmp.ge.s32.totalorder %s28, 1
    %s30 = scalar_select %p29, 0, %s28
    %s31 = ssub.s32 %s19, %s26
    %p32 = scmp.eq.s32.totalorder %s31, 0
    %s34 = sadd.s32 %s33, 1
    %s35 = scalar_select %p32, %s33, %s34
    %p38 = pneg %p32
    %p39 = scmp.eq.s32.totalorder %s11, 1
    %p40 = por %p38, %p39
    %p41 = scmp.ne.s32.totalorder %s33, %s36
    %p42 = scmp.eq.s32.totalorder %s11, 0
    %p43 = por %p41, %p42
    %p44 = scmp.ne.s32.totalorder %s33, %s36
    %p45 = scmp.eq.s32.totalorder %s16, 1
    %p46 = por %p44, %p45
    %p47 = scmp.ne.s32.totalorder %s36, %s37
    %p48 = scmp.eq.s32.totalorder %s16, 0
    %p49 = por %p47, %p48
    %p50 = scmp.ne.s32.totalorder %s36, %s37
    %p51 = scmp.eq.s32.totalorder %s17, 1
    %p52 = por %p50, %p51
    %p54 = scmp.ne.s32.totalorder %s37, %s53
    %p55 = scmp.eq.s32.totalorder %s17, 0
    %p56 = por %p54, %p55
    %s57 = ssub.s32 %s18, %s30
    %p58 = scmp.eq.s32.totalorder %s57, 0
    %s60 = sadd.s32 %s59, 1
    %s61 = scalar_select %p58, %s59, %s60
    %p64 = pneg %p58
    %p65 = scmp.eq.s32.totalorder %s11, 1
    %p66 = por %p64, %p65
    %p67 = scmp.ne.s32.totalorder %s59, %s62
    %p68 = scmp.eq.s32.totalorder %s11, 0
    %p69 = por %p67, %p68
    %p70 = scmp.ne.s32.totalorder %s59, %s62
    %p71 = scmp.eq.s32.totalorder %s16, 1
    %p72 = por %p70, %p71
    %p73 = scmp.ne.s32.totalorder %s62, %s63
    %p74 = scmp.eq.s32.totalorder %s16, 0
    %p75 = por %p73, %p74
    %p76 = scmp.ne.s32.totalorder %s62, %s63
    %p77 = scmp.eq.s32.totalorder %s17, 1
    %p78 = por %p76, %p77
    %p80 = scmp.ne.s32.totalorder %s63, %s79
    %p81 = scmp.eq.s32.totalorder %s17, 0
    %p82 = por %p80, %p81
    %s83 = ssub.s32 %s18, %s30
    %p84 = scmp.eq.s32.totalorder %s83, 0
    %s86 = sadd.s32 %s85, 1
    %s87 = scalar_select %p84, %s85, %s86
    %p90 = pneg %p84
    %p91 = scmp.eq.s32.totalorder %s11, 1
    %p92 = por %p90, %p91
    %p93 = scmp.ne.s32.totalorder %s85, %s88
    %p94 = scmp.eq.s32.totalorder %s11, 0
    %p95 = por %p93, %p94
    %p96 = scmp.ne.s32.totalorder %s85, %s88
    %p97 = scmp.eq.s32.totalorder %s16, 1
    %p98 = por %p96, %p97
    %p99 = scmp.ne.s32.totalorder %s88, %s89
    %p100 = scmp.eq.s32.totalorder %s16, 0
    %p101 = por %p99, %p100
    %p102 = scmp.ne.s32.totalorder %s88, %s89
    %p103 = scmp.eq.s32.totalorder %s17, 1
    %p104 = por %p102, %p103
    %p106 = scmp.ne.s32.totalorder %s89, %s105
    %p107 = scmp.eq.s32.totalorder %s17, 0
    %p108 = por %p106, %p107
    %s110 = sadd.s32 %s109, 1
    %p113 = scmp.eq.s32.totalorder %s11, 1
    %p114 = scmp.ne.s32.totalorder %s109, %s111
    %p115 = scmp.eq.s32.totalorder %s11, 0
    %p116 = por %p114, %p115
    %p117 = scmp.ne.s32.totalorder %s109, %s111
    %p118 = scmp.eq.s32.totalorder %s16, 1
    %p119 = por %p117, %p118
    %p120 = scmp.ne.s32.totalorder %s111, %s112
    %p121 = scmp.eq.s32.totalorder %s16, 0
    %p122 = por %p120, %p121
    %p123 = scmp.ne.s32.totalorder %s111, %s112
    %p124 = scmp.eq.s32.totalorder %s17, 1
    %p125 = por %p123, %p124
    %p127 = scmp.ne.s32.totalorder %s112, %s126
    %p128 = scmp.eq.s32.totalorder %s17, 0
    %p129 = por %p127, %p128
    %s130 = ssub.s32 %s18, %s30
    %p131 = scmp.eq.s32.totalorder %s130, 0
    %s133 = sadd.s32 %s132, 1
    %s134 = scalar_select %p131, %s132, %s133
    %p137 = pneg %p131
    %p138 = scmp.eq.s32.totalorder %s11, 1
    %p139 = por %p137, %p138
    %p140 = scmp.ne.s32.totalorder %s132, %s135
    %p141 = scmp.eq.s32.totalorder %s11, 0
    %p142 = por %p140, %p141
    %p143 = scmp.ne.s32.totalorder %s132, %s135
    %p144 = scmp.eq.s32.totalorder %s16, 1
    %p145 = por %p143, %p144
    %p146 = scmp.ne.s32.totalorder %s135, %s136
    %p147 = scmp.eq.s32.totalorder %s16, 0
    %p148 = por %p146, %p147
    %p149 = scmp.ne.s32.totalorder %s135, %s136
    %p150 = scmp.eq.s32.totalorder %s17, 1
    %p151 = por %p149, %p150
    %p153 = scmp.ne.s32.totalorder %s136, %s152
    %p154 = scmp.eq.s32.totalorder %s17, 0
    %p155 = por %p153, %p154
    %s156 = ssub.s32 %s19, %s26
    %s157 = ssub.s32 %s18, %s30
    %s158 = sor.u32 %s156, %s157
    %p159 = scmp.eq.s32.totalorder %s158, 0
    %s161 = sadd.s32 %s160, 1
    %s162 = scalar_select %p159, %s160, %s161
    %p165 = pneg %p159
    %p166 = scmp.eq.s32.totalorder %s11, 1
    %p167 = por %p165, %p166
    %p168 = scmp.ne.s32.totalorder %s160, %s163
    %p169 = scmp.eq.s32.totalorder %s11, 0
    %p170 = por %p168, %p169
    %p171 = scmp.ne.s32.totalorder %s160, %s163
    %p172 = scmp.eq.s32.totalorder %s16, 1
    %p173 = por %p171, %p172
    %p174 = scmp.ne.s32.totalorder %s163, %s164
    %p175 = scmp.eq.s32.totalorder %s16, 0
    %p176 = por %p174, %p175
    %p177 = scmp.ne.s32.totalorder %s163, %s164
    %p178 = scmp.eq.s32.totalorder %s17, 1
    %p179 = por %p177, %p178
    %p181 = scmp.ne.s32.totalorder %s164, %s180
    %p182 = scmp.eq.s32.totalorder %s17, 0
    %p183 = por %p181, %p182
    %p184 = scmp.le.s32.totalorder 1, %s11
    %p185 = scmp.lt.s32.totalorder %s11, 3
    %p186 = pnand %p184, %p185
    %p187 = pneg %p186
    // Predicated region
    $region9: #{lora_linear_forward.1} parent=5 // pred_check
      _
    $region10: #{lora_linear_forward.1} parent=5 // pred_check_branch
      %189 = sbr.rel (%p186) target = $region12
    $region11: #{lora_linear_forward.1} parent=5 // pred_region
      %s190 = ssub.s32 %s11, 1
      // Predicated region
      $region13: #{lora_linear_forward.1} parent=11 // pred_check
        %p191 = pneg %p75
      $region14: #{lora_linear_forward.1} parent=11 // pred_check_branch
        %193 = sbr.rel (%p191) target = $region16
      $region15: #{lora_linear_forward.1} parent=11 // pred_region
        %p194 = scmp.lt.s32.totalorder %s20, 0
        %s195 = scalar_select %p194, %s20, 0
        %s196 = smul.addr %s195, 4
        %s197 = scalar_lea.vmem %s1, %s196
      $region16: #{lora_linear_forward.1} parent=11 // pred_fallthru
        _
      // Predicated region
      $region17: #{lora_linear_forward.1} parent=11 // pred_check
        %p198 = pneg %p101
      $region18: #{lora_linear_forward.1} parent=11 // pred_check_branch
        %200 = sbr.rel (%p198) target = $region20
      $region19: #{lora_linear_forward.1} parent=11 // pred_region
        %p201 = scmp.lt.s32.totalorder %s20, 0
        %s202 = scalar_select %p201, %s20, 0
        %s203 = scalar_lea.vmem %s2, %s202
      $region20: #{lora_linear_forward.1} parent=11 // pred_fallthru
        _
      // Predicated region
      $region21: #{lora_linear_forward.1} parent=11 // pred_check
        %p204 = pneg %p122
      $region22: #{lora_linear_forward.1} parent=11 // pred_check_branch
        %206 = sbr.rel (%p204) target = $region24
      $region23: #{lora_linear_forward.1} parent=11 // pred_region
        _
      $region24: #{lora_linear_forward.1} parent=11 // pred_fallthru
        _
      // Predicated region
      $region25: #{lora_linear_forward.1} parent=11 // pred_check
        %p207 = pneg %p148
      $region26: #{lora_linear_forward.1} parent=11 // pred_check_branch
        %209 = sbr.rel (%p207) target = $region28
      $region27: #{lora_linear_forward.1} parent=11 // pred_region
        %p210 = scmp.lt.s32.totalorder %s20, 0
        %s211 = scalar_select %p210, %s20, 0
        %s212 = smul.addr %s211, 8
        %s213 = scalar_lea.vmem %s4, %s212
      $region28: #{lora_linear_forward.1} parent=11 // pred_fallthru
        _
    $region12: #{lora_linear_forward.1} parent=5 // pred_fallthru
      _
    %p214 = scmp.lt.s32.totalorder %s11, 2
    // Predicated region
    $region29: #{lora_linear_forward.1} parent=5 // pred_check
      %p215 = pneg %p214
    $region30: #{lora_linear_forward.1} parent=5 // pred_check_branch
      %217 = sbr.rel (%p215) target = $region32
    $region31: #{lora_linear_forward.1} parent=5 // pred_region
      // Predicated region
      $region33: #{lora_linear_forward.1} parent=31 // pred_check
        %p218 = pneg %p43
      $region34: #{lora_linear_forward.1} parent=31 // pred_check_branch
        %220 = sbr.rel (%p218) target = $region36
      $region35: #{lora_linear_forward.1} parent=31 // pred_region
        %p221 = scmp.lt.s32.totalorder %s19, 1
        %s222 = scalar_select %p221, %s19, 1
        %s223 = smul.addr %s222, 4
        %s224 = scalar_lea.vmem %s0, %s223
      $region36: #{lora_linear_forward.1} parent=31 // pred_fallthru
        _
    $region32: #{lora_linear_forward.1} parent=5 // pred_fallthru
      _
    %p225 = scmp.le.s32.totalorder 1, %s11
    %p226 = scmp.lt.s32.totalorder %s11, 3
    %p227 = pnand %p225, %p226
    %p228 = pneg %p227
    // Predicated region
    $region37: #{lora_linear_forward.1} parent=5 // pred_check
      _
    $region38: #{lora_linear_forward.1} parent=5 // pred_check_branch
      %230 = sbr.rel (%p227) target = $region40
    $region39: #{lora_linear_forward.1} parent=5 // pred_region
      %s231 = ssub.s32 %s11, 1
      %p232 = scmp.lt.s32.totalorder %s21, 1
      %s233 = scalar_select %p232, %s21, 1
      %s234 = smul.addr %s233, 4
      %s235 = scalar_lea.vmem %s0, %s234
      %p236 = pneg %p49
      %p237 = pneg %p46
      %p238 = scmp.lt.s32.totalorder %s20, 0
      %s239 = scalar_select %p238, %s20, 0
      %s240 = smul.addr %s239, 4
      %s241 = scalar_lea.vmem %s1, %s240
      %p242 = pneg %p75
      %p243 = pneg %p72
      %p244 = scmp.lt.s32.totalorder %s20, 0
      %s245 = scalar_select %p244, %s20, 0
      %s246 = scalar_lea.vmem %s2, %s245
      %p247 = pneg %p101
      %p248 = pneg %p98
      %p249 = pneg %p122
      %p250 = pneg %p119
      %p251 = scmp.lt.s32.totalorder %s20, 0
      %s252 = scalar_select %p251, %s20, 0
      %s253 = smul.addr %s252, 8
      %s254 = scalar_lea.vmem %s4, %s253
      %p255 = pneg %p148
      %p256 = pneg %p145
      %p257 = pneg %p176
      %p258 = pneg %p173
      %p259 = scmp.lt.s32.totalorder %s21, 1
      %s260 = scalar_select %p259, %s21, 1
      %p261 = scmp.lt.s32.totalorder %s20, 0
      %s262 = scalar_select %p261, %s20, 0
      %s263 = sadd.s32 %s262, %s260
      %s264 = smul.addr %s263, 8
      %s265 = scalar_lea.vmem %s5, %s264
      %p266 = scmp.lt.s32.totalorder %s21, 1
      %s267 = scalar_select %p266, %s21, 1
      %s268 = smul.addr %s267, 4
      %s269 = scalar_lea.vmem %s0, %s268
      %p270 = scmp.lt.s32.totalorder %s20, 0
      %s271 = scalar_select %p270, %s20, 0
      %s272 = smul.addr %s271, 4
      %s273 = scalar_lea.vmem %s1, %s272
      %p274 = scmp.lt.s32.totalorder %s20, 0
      %s275 = scalar_select %p274, %s20, 0
      %s276 = scalar_lea.vmem %s2, %s275
      %p277 = scmp.lt.s32.totalorder %s20, 0
      %s278 = scalar_select %p277, %s20, 0
      %s279 = smul.addr %s278, 8
      %s280 = scalar_lea.vmem %s4, %s279
      %p281 = scmp.lt.s32.totalorder %s21, 1
      %s282 = scalar_select %p281, %s21, 1
      %p283 = scmp.lt.s32.totalorder %s20, 0
      %s284 = scalar_select %p283, %s20, 0
      %s285 = sadd.s32 %s284, %s282
      %s286 = smul.addr %s285, 8
      %s287 = scalar_lea.vmem %s5, %s286
      %v289 = vld [vmem:[%s269] sm:$0xf]
      %v290 = vld [vmem:[%s273] sm:$0xf]
      %v291 = vld [vmem:[%s273 + $0x4] sm:$0xf]
      %v292 = vld [vmem:[%s273 + $0x8] sm:$0xf]
      %v293 = vld [vmem:[%s273 + $0xc] sm:$0xf]
      %v294 = vld [vmem:[%s3] sm:$0xf]
      %v295 = vld [vmem:[%s3 + $0x4] sm:$0xf]
      %v296 = vld [vmem:[%s3 + $0x8] sm:$0xf]
      %v297 = vld [vmem:[%s3 + $0xc] sm:$0xf]
      %v302 = vunpack.c.l.b16 %v294
      %v303 = vunpack.c.l.b16 %v295
      %v304 = vunpack.c.l.b16 %v296
      %v305 = vunpack.c.l.b16 %v297
      %v306 = vpack.c.b16 %v303, %v302
      %v307 = vpack.c.b16 %v305, %v304
      %vm310 = vcmask 261120
      %v312 = vsel %vm310, %v289, 0
      %314 = vmatprep.subr.bf16.mxu0 0
      %315 = vmatpush1.bf16.msra.mxu0 %v306
      %316 = vmatprep.subr.bf16.mxu0 0
      %317 = vmatpush1.bf16.msra.mxu0 %v307
      %318 = vmatprep.subr.bf16.mxu0 0
      %319 = vmatpush1.bf16.msra.mxu0 0
      %320 = vmatprep.subr.bf16.mxu0 0
      %321 = vmatpush1.bf16.msra.mxu0 0
      %322 = vmatprep.subr.bf16.mxu0 0
      %323 = vmatpush1.bf16.msra.mxu0 0
      %324 = vmatprep.subr.bf16.mxu0 0
      %325 = vmatpush1.bf16.msra.mxu0 0
      %326 = vmatprep.subr.bf16.mxu0 0
      %327 = vmatpush1.bf16.msra.mxu0 0
      %328 = vmatprep.subr.bf16.mxu0 0
      %329 = vmatpush1.bf16.msra.mxu0 0
      %330 = vmatprep.subr.bf16.mxu0 0
      %331 = vmatpush1.bf16.msra.mxu0 0
      %332 = vmatprep.subr.bf16.mxu0 0
      %333 = vmatpush1.bf16.msra.mxu0 0
      %334 = vmatprep.subr.bf16.mxu0 0
      %335 = vmatpush1.bf16.msra.mxu0 0
      %336 = vmatprep.subr.bf16.mxu0 0
      %337 = vmatpush1.bf16.msra.mxu0 0
      %338 = vmatprep.subr.bf16.mxu0 0
      %339 = vmatpush1.bf16.msra.mxu0 0
      %340 = vmatprep.subr.bf16.mxu0 0
      %341 = vmatpush1.bf16.msra.mxu0 0
      %342 = vmatprep.subr.bf16.mxu0 0
      %343 = vmatpush1.bf16.msra.mxu0 0
      %344 = vmatprep.subr.bf16.mxu0 0
      %345 = vmatpush1.bf16.msra.mxu0 0
      %346 = vmatprep.mubr.bf16.mxu0 0
      %347 = vmatmul.mubr.bf16.gmra.mrb[0].mxu0 %v312
      %v348 = vpop.f32.mrb[0].mxu0
      %v349 = vadd.f32 0.0, %v348
      %v350 = vpop.f32.mrb[0].mxu0
      %v351 = vpop.f32.mrb[0].mxu0
      %v352 = vpop.f32.mrb[0].mxu0
      %353 = vdwg.mxu0
      %v354 = vld [vmem:[%s280] sm:$0xff]
      %vm355 = vcmask 64512
      %v357 = vsel %vm355, %v349, 0
      %359 = vmatprep.subr.mxu0 0.0
      %360 = vmatpush1.msra.mxu0 %v354
      %361 = vmatprep.subr.mxu0 0.0
      %362 = vmatpush1.msra.mxu0 0.0
      %363 = vmatprep.subr.mxu0 0.0
      %364 = vmatpush1.msra.mxu0 0.0
      %365 = vmatprep.subr.mxu0 0.0
      %366 = vmatpush1.msra.mxu0 0.0
      %367 = vmatprep.subr.mxu0 0.0
      %368 = vmatpush1.msra.mxu0 0.0
      %369 = vmatprep.subr.mxu0 0.0
      %370 = vmatpush1.msra.mxu0 0.0
      %371 = vmatprep.subr.mxu0 0.0
      %372 = vmatpush1.msra.mxu0 0.0
      %373 = vmatprep.subr.mxu0 0.0
      %374 = vmatpush1.msra.mxu0 0.0
      %375 = vmatprep.subr.mxu0 0.0
      %376 = vmatpush1.msra.mxu0 0.0
      %377 = vmatprep.subr.mxu0 0.0
      %378 = vmatpush1.msra.mxu0 0.0
      %379 = vmatprep.subr.mxu0 0.0
      %380 = vmatpush1.msra.mxu0 0.0
      %381 = vmatprep.subr.mxu0 0.0
      %382 = vmatpush1.msra.mxu0 0.0
      %383 = vmatprep.subr.mxu0 0.0
      %384 = vmatpush1.msra.mxu0 0.0
      %385 = vmatprep.subr.mxu0 0.0
      %386 = vmatpush1.msra.mxu0 0.0
      %387 = vmatprep.subr.mxu0 0.0
      %388 = vmatpush1.msra.mxu0 0.0
      %389 = vmatprep.subr.mxu0 0.0
      %390 = vmatpush1.msra.mxu0 0.0
      %391 = vmatprep.subr.mxu0 0.0
      %392 = vmatpush1.msra.mxu0 0.0
      %393 = vmatprep.subr.mxu0 0.0
      %394 = vmatpush1.msra.mxu0 0.0
      %395 = vmatprep.subr.mxu0 0.0
      %396 = vmatpush1.msra.mxu0 0.0
      %397 = vmatprep.subr.mxu0 0.0
      %398 = vmatpush1.msra.mxu0 0.0
      %399 = vmatprep.subr.mxu0 0.0
      %400 = vmatpush1.msra.mxu0 0.0
      %401 = vmatprep.subr.mxu0 0.0
      %402 = vmatpush1.msra.mxu0 0.0
      %403 = vmatprep.subr.mxu0 0.0
      %404 = vmatpush1.msra.mxu0 0.0
      %405 = vmatprep.subr.mxu0 0.0
      %406 = vmatpush1.msra.mxu0 0.0
      %407 = vmatprep.subr.mxu0 0.0
      %408 = vmatpush1.msra.mxu0 0.0
      %409 = vmatprep.subr.mxu0 0.0
      %410 = vmatpush1.msra.mxu0 0.0
      %411 = vmatprep.subr.mxu0 0.0
      %412 = vmatpush1.msra.mxu0 0.0
      %413 = vmatprep.subr.mxu0 0.0
      %414 = vmatpush1.msra.mxu0 0.0
      %415 = vmatprep.subr.mxu0 0.0
      %416 = vmatpush1.msra.mxu0 0.0
      %417 = vmatprep.subr.mxu0 0.0
      %418 = vmatpush1.msra.mxu0 0.0
      %419 = vmatprep.subr.mxu0 0.0
      %420 = vmatpush1.msra.mxu0 0.0
      %421 = vmatprep.subr.mxu0 0.0
      %422 = vmatpush1.msra.mxu0 0.0
      %423 = vmatprep.mubr.f32.mxu0 0.0
      %424 = vmatmul.mubr.f32.gmra.mrb[0].mxu0 %v357
      %v425 = vpop.f32.mrb[0].mxu0
      %v426 = vadd.f32 0.0, %v425
      %v427 = vpop.f32.mrb[0].mxu0
      %428 = vdwg.mxu0
      %v433 = vunpack.c.l.b16 %v290
      %v434 = vunpack.c.l.b16 %v291
      %v435 = vunpack.c.l.b16 %v292
      %v436 = vunpack.c.l.b16 %v293
      %v437 = vpack.c.b16 %v434, %v433
      %v438 = vpack.c.b16 %v436, %v435
      %441 = vmatprep.subr.bf16.mxu0 0
      %442 = vmatpush1.bf16.msra.mxu0 %v437
      %443 = vmatprep.subr.bf16.mxu0 0
      %444 = vmatpush1.bf16.msra.mxu0 %v438
      %445 = vmatprep.subr.bf16.mxu0 0
      %446 = vmatpush1.bf16.msra.mxu0 0
      %447 = vmatprep.subr.bf16.mxu0 0
      %448 = vmatpush1.bf16.msra.mxu0 0
      %449 = vmatprep.subr.bf16.mxu0 0
      %450 = vmatpush1.bf16.msra.mxu0 0
      %451 = vmatprep.subr.bf16.mxu0 0
      %452 = vmatpush1.bf16.msra.mxu0 0
      %453 = vmatprep.subr.bf16.mxu0 0
      %454 = vmatpush1.bf16.msra.mxu0 0
      %455 = vmatprep.subr.bf16.mxu0 0
      %456 = vmatpush1.bf16.msra.mxu0 0
      %457 = vmatprep.subr.bf16.mxu0 0
      %458 = vmatpush1.bf16.msra.mxu0 0
      %459 = vmatprep.subr.bf16.mxu0 0
      %460 = vmatpush1.bf16.msra.mxu0 0
      %461 = vmatprep.subr.bf16.mxu0 0
      %462 = vmatpush1.bf16.msra.mxu0 0
      %463 = vmatprep.subr.bf16.mxu0 0
      %464 = vmatpush1.bf16.msra.mxu0 0
      %465 = vmatprep.subr.bf16.mxu0 0
      %466 = vmatpush1.bf16.msra.mxu0 0
      %467 = vmatprep.subr.bf16.mxu0 0
      %468 = vmatpush1.bf16.msra.mxu0 0
      %469 = vmatprep.subr.bf16.mxu0 0
      %470 = vmatpush1.bf16.msra.mxu0 0
      %471 = vmatprep.subr.bf16.mxu0 0
      %472 = vmatpush1.bf16.msra.mxu0 0
      %473 = vmatprep.mubr.bf16.mxu0 0
      %474 = vmatmul.mubr.bf16.gmra.mrb[0].mxu0 %v312
      %v475 = vpop.f32.mrb[0].mxu0
      %v476 = vadd.f32 %v426, %v475
      %v477 = vpop.f32.mrb[0].mxu0
      %v478 = vpop.f32.mrb[0].mxu0
      %v479 = vpop.f32.mrb[0].mxu0
      %480 = vdwg.mxu0
      %v481 = vld [vmem:[%s276] sm:$0x1]
      %v483 = vlaneseq
      %v484 = vshrl.u32 %v483, 7
      %v485 = vsub.s32 0, %v484
      %v486 = vrot.slane %v481, %v485
      %v488 = vadd.f32 %v476, %v486
      %489 = vst [vmem:[%s287] sm:$0xff] %v488
      %p490 = scmp.lt.s32.totalorder %s21, 1
      %s491 = scalar_select %p490, %s21, 1
      %p492 = scmp.lt.s32.totalorder %s20, 0
      %s493 = scalar_select %p492, %s20, 0
      %s494 = sadd.s32 %s493, %s491
      %s495 = smul.addr %s494, 8
      %s496 = scalar_lea.vmem %s5, %s495
      // Predicated region
      $region41: #{lora_linear_forward.1} parent=39 // pred_check
        %p497 = pneg %p173
      $region42: #{lora_linear_forward.1} parent=39 // pred_check_branch
        %499 = sbr.rel (%p497) target = $region44
      $region43: #{lora_linear_forward.1} parent=39 // pred_region
        _
      $region44: #{lora_linear_forward.1} parent=39 // pred_fallthru
        _
    $region40: #{lora_linear_forward.1} parent=5 // pred_fallthru
      _
    %p500 = scmp.le.s32.totalorder 2, %s11
    // Predicated region
    $region45: #{lora_linear_forward.1} parent=5 // pred_check
      %p501 = pneg %p500
    $region46: #{lora_linear_forward.1} parent=5 // pred_check_branch
      %503 = sbr.rel (%p501) target = $region48
    $region47: #{lora_linear_forward.1} parent=5 // pred_region
      %s504 = ssub.s32 %s11, 2
      // Predicated region
      $region49: #{lora_linear_forward.1} parent=47 // pred_check
        %p505 = pneg %p179
      $region50: #{lora_linear_forward.1} parent=47 // pred_check_branch
        %507 = sbr.rel (%p505) target = $region52
      $region51: #{lora_linear_forward.1} parent=47 // pred_region
        %p508 = scmp.lt.s32.totalorder %s23, 1
        %s509 = scalar_select %p508, %s23, 1
        %p510 = scmp.lt.s32.totalorder %s22, 0
        %s511 = scalar_select %p510, %s22, 0
        %s512 = sadd.s32 %s511, %s509
        %s513 = smul.addr %s512, 8
        %s514 = scalar_lea.vmem %s5, %s513
      $region52: #{lora_linear_forward.1} parent=47 // pred_fallthru
        _
    $region48: #{lora_linear_forward.1} parent=5 // pred_fallthru
      _
  $region6: #{lora_linear_forward.1} parent=0 // loop_footer
    %s15 = sadd.s32 1, %s11
  $region7: #{lora_linear_forward.1} parent=0 // loop_footer_branch
    %10 = sbr.rel target = $region3
  $region8: #{lora_linear_forward.1} parent=0 // loop_exit
    _

</llo_original>
